<compile_context>
chip_gen: v7x
topology: tpu7x:2x2x1
jax: 0.10.0
libtpu: 0.0.40
codegen_flags: <defaults>
</compile_context>

<pallas_src>
import jax
import jax.numpy as jnp
import numpy as np
from jax.experimental import pallas as pl
from jax.experimental.pallas import tpu as pltpu


def attention_pool_kernel(hs_ref, w1_ref, b1_ref, w2_ref, out_ref):
    # hs_ref : (Bt, T, H) bf16   hidden states for Bt batch elements
    # w1_ref : (H, H)     bf16   first Linear weight, pre-transposed (in, out)
    # b1_ref : (1, H)     f32    first Linear bias
    # w2_ref : (1, H)     f32    second Linear weight as a row (out dim == 1)
    # out_ref: (Bt, H)    f32    attention-pooled features
    Bt, T, H = hs_ref.shape
    hs = hs_ref[...]                                    # (Bt, T, H) bf16

    # ---- Linear(H, H) + tanh: fill the MXU M dim with Bt*T rows ----------
    hs2d = hs.reshape(Bt * T, H)                        # (Bt*T, H) bf16
    a = jnp.tanh(
        jnp.dot(hs2d, w1_ref[...], preferred_element_type=jnp.float32)
        + b1_ref[...]
    )                                                   # (Bt*T, H) f32

    # ---- Linear(H, 1): VPU multiply + lane reduction (no N=1 MXU pass) ----
    # b2 bias omitted: a per-row constant offset cancels in the softmax.
    a3 = a.reshape(Bt, T, H)
    scores = jnp.sum(a3 * w2_ref[...], axis=-1)         # (Bt, T) f32

    # ---- softmax over T: numerator only, single divide at the end ---------
    m = jnp.max(scores, axis=-1, keepdims=True)         # (Bt, 1)
    e = jnp.exp(scores - m)                             # (Bt, T) f32
    denom = jnp.sum(e, axis=-1, keepdims=True)          # (Bt, 1)

    # ---- weighted sum on the MXU: (Bt,1,T) x (Bt,T,H) -> (Bt,H) -----------
    num = jnp.einsum(
        "bqt,bth->bqh",
        e.astype(hs.dtype)[:, None, :],                 # bf16 MXU operand
        hs,
        preferred_element_type=jnp.float32,
    ).reshape(Bt, H)                                    # (Bt, H) f32

    inv = pl.reciprocal(denom, approx=True)             # EUP slot
    out_ref[...] = (num * inv).astype(out_ref.dtype)


def attention_pool(hidden_states, w1_t, b1, w2_row, *, b_tile=8):
    """Attention pooling of WavLM hidden states.

    hidden_states: (B, T, H) float32 (= wavlm(...).last_hidden_state)
    w1_t: (H, H) first Linear weight, pre-transposed (in, out)
    b1:   (1, H) first Linear bias
    w2_row: (1, H) second Linear weight as a row (its bias cancels in softmax)
    """
    B, T, H = hidden_states.shape
    assert B % b_tile == 0, "batch must be divisible by b_tile"

    # MXU operands in bf16; accumulation / elementwise math stays f32 inside.
    hs_bf16 = hidden_states.astype(jnp.bfloat16)
    w1_bf16 = w1_t.astype(jnp.bfloat16)

    grid = (B // b_tile,)  # >= 2 steps so v7x's two TensorCores both work
    return pl.pallas_call(
        attention_pool_kernel,
        out_shape=jax.ShapeDtypeStruct((B, H), jnp.float32),
        grid=grid,
        in_specs=[
            pl.BlockSpec((b_tile, T, H), lambda b: (b, 0, 0)),
            pl.BlockSpec((H, H), lambda b: (0, 0)),   # constant across grid
            pl.BlockSpec((1, H), lambda b: (0, 0)),
            pl.BlockSpec((1, H), lambda b: (0, 0)),
        ],
        out_specs=pl.BlockSpec((b_tile, H), lambda b: (b, 0)),
        compiler_params=pltpu.CompilerParams(
            dimension_semantics=("parallel",)
        ),
    )(hs_bf16, w1_bf16, b1, w2_row)


def attention_pool_ref(hidden_states, w1_t, b1, w2_row, b2):
    # Pure-JAX f32 reference matching the PyTorch AttentionLayer semantics
    # (keeps the b2 bias the kernel drops, verifying it cancels in softmax).
    a = jnp.tanh(hidden_states @ w1_t + b1)                     # (B, T, H)
    scores = jnp.einsum("bth,h->bt", a, w2_row[0]) + b2         # (B, T)
    w = jax.nn.softmax(scores, axis=-1)                         # (B, T)
    return jnp.sum(hidden_states * w[..., None], axis=1)        # (B, H)


if __name__ == "__main__":
    # Small shapes consistent with the module's forward: B batch elements,
    # T WavLM frames, hidden size H.  H=128 keeps the output lane-dense and
    # B_tile*T = 128 fills the MXU M dimension per grid step.
    B, T, H = 16, 16, 128

    key = jax.random.PRNGKey(0)
    k_hs, k_w1, k_b1, k_w2, k_b2 = jax.random.split(key, 5)

    # Deterministic synthetic "last_hidden_state" from the WavLM backbone.
    hidden_states = jax.random.normal(k_hs, (B, T, H), dtype=jnp.float32)

    # Deterministic AttentionLayer parameters.
    # PyTorch Linear: y = x @ W.T + b with W of shape [out, in]; weights are
    # stored transposed (in, out) so the kernel does x @ W_t.
    bound = 1.0 / np.sqrt(H)
    w1_t = jax.random.uniform(k_w1, (H, H), jnp.float32, -bound, bound)
    b1 = jax.random.uniform(k_b1, (1, H), jnp.float32, -bound, bound)
    w2_row = jax.random.uniform(k_w2, (1, H), jnp.float32, -bound, bound)
    b2 = jax.random.uniform(k_b2, (), jnp.float32, -bound, bound)  # ref only

    out = attention_pool(hidden_states, w1_t, b1, w2_row, b_tile=8)
    out = jax.block_until_ready(out)

    ref = attention_pool_ref(hidden_states, w1_t, b1, w2_row, b2)
    # Tolerance accounts for bf16 MXU operands and the approx EUP reciprocal.
    np.testing.assert_allclose(np.asarray(out), np.asarray(ref),
                               rtol=2e-2, atol=2e-2)

    print("KERNEL_OK")
</pallas_src>

<mosaic_0001>
module attributes {stable_mosaic.version = 11 : i64} {
  func.func @attention_pool_kernel(%arg0: i32, %arg1: memref<8x16x128xbf16, #tpu.memory_space<vmem>>, %arg2: memref<128x128xbf16, #tpu.memory_space<vmem>>, %arg3: memref<1x128xf32, #tpu.memory_space<vmem>>, %arg4: memref<1x128xf32, #tpu.memory_space<vmem>>, %arg5: memref<8x128xf32, #tpu.memory_space<vmem>>) attributes {dimension_semantics = [#tpu.dimension_semantics<parallel>], iteration_bounds = array<i64: 2>, scalar_prefetch = 0 : i64, scratch_operands = 0 : i64, tpu.core_type = #tpu.core_type<tc>, window_params = [{transform_indices = @transform_0, window_bounds = array<i64: 8, 16, 128>}, {pipeline_mode = #tpu.pipeline_mode<synchronous>, transform_indices = @transform_1, window_bounds = array<i64: 128, 128>}, {pipeline_mode = #tpu.pipeline_mode<synchronous>, transform_indices = @transform_2, window_bounds = array<i64: 1, 128>}, {pipeline_mode = #tpu.pipeline_mode<synchronous>, transform_indices = @transform_3, window_bounds = array<i64: 1, 128>}, {transform_indices = @transform_4, window_bounds = array<i64: 8, 128>}]} {
    %c0 = arith.constant 0 : index
    %c0_0 = arith.constant 0 : index
    %c0_1 = arith.constant 0 : index
    %0 = vector.load %arg1[%c0, %c0_0, %c0_1] : memref<8x16x128xbf16, #tpu.memory_space<vmem>>, vector<8x16x128xbf16>
    %1 = vector.shape_cast %0 : vector<8x16x128xbf16> to vector<128x128xbf16>
    %c0_2 = arith.constant 0 : index
    %c0_3 = arith.constant 0 : index
    %2 = vector.load %arg2[%c0_2, %c0_3] : memref<128x128xbf16, #tpu.memory_space<vmem>>, vector<128x128xbf16>
    %cst = arith.constant dense<0.000000e+00> : vector<128x128xf32>
    %3 = tpu.matmul %1, %2, %cst {dimension_numbers = #tpu.dot_dimension_numbers<[1], [0], [0], [1], [0, 0, 1, 1], [], []>} : vector<128x128xbf16>, vector<128x128xbf16>, vector<128x128xf32> -> vector<128x128xf32>
    %c0_4 = arith.constant 0 : index
    %c0_5 = arith.constant 0 : index
    %4 = vector.load %arg3[%c0_4, %c0_5] : memref<1x128xf32, #tpu.memory_space<vmem>>, vector<1x128xf32>
    %5 = vector.broadcast %4 : vector<1x128xf32> to vector<128x128xf32>
    %6 = arith.addf %3, %5 : vector<128x128xf32>
    %7 = math.tanh %6 : vector<128x128xf32>
    %8 = vector.shape_cast %7 : vector<128x128xf32> to vector<8x16x128xf32>
    %c0_6 = arith.constant 0 : index
    %c0_7 = arith.constant 0 : index
    %9 = vector.load %arg4[%c0_6, %c0_7] : memref<1x128xf32, #tpu.memory_space<vmem>>, vector<1x128xf32>
    %10 = vector.shape_cast %9 : vector<1x128xf32> to vector<1x1x128xf32>
    %11 = vector.broadcast %10 : vector<1x1x128xf32> to vector<8x16x128xf32>
    %12 = arith.mulf %8, %11 : vector<8x16x128xf32>
    %cst_8 = arith.constant dense<0.000000e+00> : vector<8x16xf32>
    %13 = vector.multi_reduction <add>, %12, %cst_8 [2] : vector<8x16x128xf32> to vector<8x16xf32>
    %cst_9 = arith.constant dense<0xFF800000> : vector<8xf32>
    %14 = vector.multi_reduction <maximumf>, %13, %cst_9 [1] : vector<8x16xf32> to vector<8xf32>
    %15 = vector.shape_cast %14 : vector<8xf32> to vector<8x1xf32>
    %16 = vector.broadcast %15 : vector<8x1xf32> to vector<8x16xf32>
    %17 = arith.subf %13, %16 : vector<8x16xf32>
    %18 = math.exp %17 : vector<8x16xf32>
    %cst_10 = arith.constant dense<0.000000e+00> : vector<8xf32>
    %19 = vector.multi_reduction <add>, %18, %cst_10 [1] : vector<8x16xf32> to vector<8xf32>
    %20 = vector.shape_cast %19 : vector<8xf32> to vector<8x1xf32>
    %21 = arith.truncf %18 : vector<8x16xf32> to vector<8x16xbf16>
    %22 = vector.shape_cast %21 : vector<8x16xbf16> to vector<8x1x16xbf16>
    "tpu.trace_start"() <{level = 10 : i32, message = "bqt,bth->bqh"}> : () -> ()
    %cst_11 = arith.constant dense<0.000000e+00> : vector<8x1x128xf32>
    %23 = tpu.matmul %22, %0, %cst_11 {dimension_numbers = #tpu.dot_dimension_numbers<[2], [1], [1], [2], [0, 0, 0, 1, 1, 2], [0], [0]>} : vector<8x1x16xbf16>, vector<8x16x128xbf16>, vector<8x1x128xf32> -> vector<8x1x128xf32>
    "tpu.trace_stop"() : () -> ()
    %24 = vector.shape_cast %23 : vector<8x1x128xf32> to vector<8x128xf32>
    %25 = tpu.reciprocal %20 {approx = true} : vector<8x1xf32> -> vector<8x1xf32>
    %26 = vector.broadcast %25 : vector<8x1xf32> to vector<8x128xf32>
    %27 = arith.mulf %24, %26 : vector<8x128xf32>
    %c0_12 = arith.constant 0 : index
    %c0_13 = arith.constant 0 : index
    %28 = vector.load %arg5[%c0_12, %c0_13] : memref<8x128xf32, #tpu.memory_space<vmem>>, vector<8x128xf32>
    tpu.vector_store %arg5[%c0_12, %c0_13], %27 {strides = array<i32>} : memref<8x128xf32, #tpu.memory_space<vmem>>, vector<8x128xf32>,
    return
  }
  func.func @transform_0(%arg0: i32) -> (i32, i32, i32) {
    %c0_i32 = arith.constant 0 : i32
    %c0_i32_0 = arith.constant 0 : i32
    %c0_i32_1 = arith.constant 0 : i32
    return %arg0, %c0_i32, %c0_i32_0 : i32, i32, i32
  }
  func.func @transform_1(%arg0: i32) -> (i32, i32) {
    %c0_i32 = arith.constant 0 : i32
    %c0_i32_0 = arith.constant 0 : i32
    %c0_i32_1 = arith.constant 0 : i32
    return %c0_i32, %c0_i32_0 : i32, i32
  }
  func.func @transform_2(%arg0: i32) -> (i32, i32) {
    %c0_i32 = arith.constant 0 : i32
    %c0_i32_0 = arith.constant 0 : i32
    %c0_i32_1 = arith.constant 0 : i32
    return %c0_i32, %c0_i32_0 : i32, i32
  }
  func.func @transform_3(%arg0: i32) -> (i32, i32) {
    %c0_i32 = arith.constant 0 : i32
    %c0_i32_0 = arith.constant 0 : i32
    %c0_i32_1 = arith.constant 0 : i32
    return %c0_i32, %c0_i32_0 : i32, i32
  }
  func.func @transform_4(%arg0: i32) -> (i32, i32) {
    %c0_i32 = arith.constant 0 : i32
    %c0_i32_0 = arith.constant 0 : i32
    return %arg0, %c0_i32 : i32, i32
  }
}

</mosaic_0001>

<llo_original>
// kernel: tpu_custom_call.1
$region0: #{tpu_custom_call.1}
  #allocation0 [shape = 'u32[]', space=smem, size = 0x4, offset = 0x4, fixed_abs, tag = 'smem constant byte address 0x4 - core index']
  #allocation1 [shape = 'u32[144,128]{1,0:T(1,128)}', space=vmem, size = 0x12000, scoped, tag = 'internal scratch']
  %s0 = inlined_call_operand.hbm [shape: bf16[16,16,128], index: 0, kind: input, shape index: {}]
  %s1 = inlined_call_operand.hbm [shape: bf16[128,128], index: 1, kind: input, shape index: {}]
  %s2 = inlined_call_operand.vmem [shape: f32[1,128], index: 2, kind: input, shape index: {}]
  %s3 = inlined_call_operand.vmem [shape: f32[1,128], index: 3, kind: input, shape index: {}]
  %s4 = inlined_call_operand.hbm [shape: f32[16,128], index: 4, kind: output, shape index: {}]
  %s5 = sld [smem:[#allocation0]]
  $region57: #{tpu_custom_call.1} parent=0
    _
  %s7 = ssub.s32 1, %s5
  %s8 = scalar_select 0, %s7, %s5
  $region1: #{tpu_custom_call.1} parent=0
    #allocation2 [shape = 'u8[65536]{0}', space=vmem, size = 0x10000, scoped, tag = 'input window, operand 0']
    #allocation3 [shape = 's32[2]{0}', space=sflag, size = 0x8, scoped, tag = 'scoped memory for tpu_custom_call.1']
    #allocation4 [shape = 's32[2]{0}', space=sflag, size = 0x8, scoped, tag = 'scoped memory for tpu_custom_call.1']
    #allocation5 [shape = 'u8[32768]{0}', space=vmem, size = 0x8000, scoped, tag = 'input window, operand 1, single buffered']
    #allocation6 [shape = 's32[1]{0}', space=sflag, size = 0x4, scoped, tag = 'scoped memory for tpu_custom_call.1']
    #allocation7 [shape = 'u8[8192]{0}', space=vmem, size = 0x2000, scoped, tag = 'output window, operand 0']
    %9 = vsyncpa [#allocation3], 0
    %s10 = scalar_lea.sflag [#allocation3], 1
    %11 = vsyncpa %s10, 0
    %12 = vsyncpa [#allocation6], 0
    %13 = vsyncpa [#allocation4], 0
    %s14 = scalar_lea.sflag [#allocation4], 1
    %15 = vsyncpa %s14, 0
    loop: start=0, step=1, limit=4
    $region2: #{tpu_custom_call.1} parent=1 // loop_pre_header
      _
    $region3: #{tpu_custom_call.1} parent=1 // loop_header
      %s17 = sphi 0, %s21
      %p18 = scmp.ge.s32.totalorder %s17, 4
      %s27 = sphi 0, %s29
      %s30 = sphi 0, %s27
      %s31 = sphi 0, %s30
      %s47 = sphi 0, %s31
      %s51 = sphi 0, %s51
      %s53 = sphi 0, %s51
      %s54 = sphi 0, %s53
      %s68 = sphi 0, %s54
      %s72 = sphi 0, %s72
      %s74 = sphi 0, %s72
      %s75 = sphi 0, %s74
      %s89 = sphi 0, %s75
      %s93 = sphi 0, %s93
      %s95 = sphi 0, %s93
      %s96 = sphi 0, %s95
      %s110 = sphi 0, %s96
      %s116 = sphi 0, %s118
      %s119 = sphi 0, %s116
      %s120 = sphi 0, %s119
      %s136 = sphi 0, %s120
    $region4: #{tpu_custom_call.1} parent=1 // loop_header_branch
      %20 = sbr.rel (%p18) target = $region8
    $region5: #{tpu_custom_call.1} parent=1 // loop_body
      %s22 = ssub.s32 %s17, 1
      %s23 = ssub.s32 %s17, 2
      %s24 = sadd.s32 %s17, 1
      %s25 = ssub.s32 %s17, %s24
      %p26 = scmp.eq.s32.totalorder %s25, 0
      %s28 = sadd.s32 %s27, 1
      %s29 = scalar_select %p26, %s27, %s28
      %p32 = pneg %p26
      %p33 = scmp.eq.s32.totalorder %s17, 1
      %p34 = por %p32, %p33
      %p35 = scmp.ne.s32.totalorder %s27, %s30
      %p36 = scmp.eq.s32.totalorder %s17, 0
      %p37 = por %p35, %p36
      %p38 = scmp.ne.s32.totalorder %s27, %s30
      %p39 = scmp.eq.s32.totalorder %s22, 1
      %p40 = por %p38, %p39
      %p41 = scmp.ne.s32.totalorder %s30, %s31
      %p42 = scmp.eq.s32.totalorder %s22, 0
      %p43 = por %p41, %p42
      %p44 = scmp.ne.s32.totalorder %s30, %s31
      %p45 = scmp.eq.s32.totalorder %s23, 1
      %p46 = por %p44, %p45
      %p48 = scmp.ne.s32.totalorder %s31, %s47
      %p49 = scmp.eq.s32.totalorder %s23, 0
      %p50 = por %p48, %p49
      %s52 = sadd.s32 %s51, 1
      %p55 = scmp.eq.s32.totalorder %s17, 1
      %p56 = scmp.ne.s32.totalorder %s51, %s53
      %p57 = scmp.eq.s32.totalorder %s17, 0
      %p58 = por %p56, %p57
      %p59 = scmp.ne.s32.totalorder %s51, %s53
      %p60 = scmp.eq.s32.totalorder %s22, 1
      %p61 = por %p59, %p60
      %p62 = scmp.ne.s32.totalorder %s53, %s54
      %p63 = scmp.eq.s32.totalorder %s22, 0
      %p64 = por %p62, %p63
      %p65 = scmp.ne.s32.totalorder %s53, %s54
      %p66 = scmp.eq.s32.totalorder %s23, 1
      %p67 = por %p65, %p66
      %p69 = scmp.ne.s32.totalorder %s54, %s68
      %p70 = scmp.eq.s32.totalorder %s23, 0
      %p71 = por %p69, %p70
      %s73 = sadd.s32 %s72, 1
      %p76 = scmp.eq.s32.totalorder %s17, 1
      %p77 = scmp.ne.s32.totalorder %s72, %s74
      %p78 = scmp.eq.s32.totalorder %s17, 0
      %p79 = por %p77, %p78
      %p80 = scmp.ne.s32.totalorder %s72, %s74
      %p81 = scmp.eq.s32.totalorder %s22, 1
      %p82 = por %p80, %p81
      %p83 = scmp.ne.s32.totalorder %s74, %s75
      %p84 = scmp.eq.s32.totalorder %s22, 0
      %p85 = por %p83, %p84
      %p86 = scmp.ne.s32.totalorder %s74, %s75
      %p87 = scmp.eq.s32.totalorder %s23, 1
      %p88 = por %p86, %p87
      %p90 = scmp.ne.s32.totalorder %s75, %s89
      %p91 = scmp.eq.s32.totalorder %s23, 0
      %p92 = por %p90, %p91
      %s94 = sadd.s32 %s93, 1
      %p97 = scmp.eq.s32.totalorder %s17, 1
      %p98 = scmp.ne.s32.totalorder %s93, %s95
      %p99 = scmp.eq.s32.totalorder %s17, 0
      %p100 = por %p98, %p99
      %p101 = scmp.ne.s32.totalorder %s93, %s95
      %p102 = scmp.eq.s32.totalorder %s22, 1
      %p103 = por %p101, %p102
      %p104 = scmp.ne.s32.totalorder %s95, %s96
      %p105 = scmp.eq.s32.totalorder %s22, 0
      %p106 = por %p104, %p105
      %p107 = scmp.ne.s32.totalorder %s95, %s96
      %p108 = scmp.eq.s32.totalorder %s23, 1
      %p109 = por %p107, %p108
      %p111 = scmp.ne.s32.totalorder %s96, %s110
      %p112 = scmp.eq.s32.totalorder %s23, 0
      %p113 = por %p111, %p112
      %s114 = ssub.s32 %s17, %s24
      %p115 = scmp.eq.s32.totalorder %s114, 0
      %s117 = sadd.s32 %s116, 1
      %s118 = scalar_select %p115, %s116, %s117
      %p121 = pneg %p115
      %p122 = scmp.eq.s32.totalorder %s17, 1
      %p123 = por %p121, %p122
      %p124 = scmp.ne.s32.totalorder %s116, %s119
      %p125 = scmp.eq.s32.totalorder %s17, 0
      %p126 = por %p124, %p125
      %p127 = scmp.ne.s32.totalorder %s116, %s119
      %p128 = scmp.eq.s32.totalorder %s22, 1
      %p129 = por %p127, %p128
      %p130 = scmp.ne.s32.totalorder %s119, %s120
      %p131 = scmp.eq.s32.totalorder %s22, 0
      %p132 = por %p130, %p131
      %p133 = scmp.ne.s32.totalorder %s119, %s120
      %p134 = scmp.eq.s32.totalorder %s23, 1
      %p135 = por %p133, %p134
      %p137 = scmp.ne.s32.totalorder %s120, %s136
      %p138 = scmp.eq.s32.totalorder %s23, 0
      %p139 = por %p137, %p138
      %p140 = scmp.le.s32.totalorder 1, %s17
      %p141 = scmp.lt.s32.totalorder %s17, 3
      %p142 = pnand %p140, %p141
      %p143 = pneg %p142
      // Predicated region
      $region9: #{tpu_custom_call.1} parent=5 // pred_check
        _
      $region10: #{tpu_custom_call.1} parent=5 // pred_check_branch
        %145 = sbr.rel (%p142) target = $region12
      $region11: #{tpu_custom_call.1} parent=5 // pred_region
        %s146 = ssub.s32 %s17, 1
        // Predicated region
        $region13: #{tpu_custom_call.1} parent=11 // pred_check
          %p147 = pneg %p64
        $region14: #{tpu_custom_call.1} parent=11 // pred_check_branch
          %149 = sbr.rel (%p147) target = $region16
        $region15: #{tpu_custom_call.1} parent=11 // pred_region
          %s151 = ssub.s32 1024, 1024
          %152 = vsyncadd [#allocation6], %s151
          %s153 = sshll.u32 [#allocation5], 4
          %s154 = int_to_ptr.vmem [resolvable:$true] %s153
          %159 = dma.hbm_to_vmem [thread:$0]  %s1, 1024, %s154, [#allocation6], 64, 64, 4
        $region16: #{tpu_custom_call.1} parent=11 // pred_fallthru
          _
        // Predicated region
        $region17: #{tpu_custom_call.1} parent=11 // pred_check
          %p160 = pneg %p85
        $region18: #{tpu_custom_call.1} parent=11 // pred_check_branch
          %162 = sbr.rel (%p160) target = $region20
        $region19: #{tpu_custom_call.1} parent=11 // pred_region
          _
        $region20: #{tpu_custom_call.1} parent=11 // pred_fallthru
          _
        // Predicated region
        $region21: #{tpu_custom_call.1} parent=11 // pred_check
          %p163 = pneg %p106
        $region22: #{tpu_custom_call.1} parent=11 // pred_check_branch
          %165 = sbr.rel (%p163) target = $region24
        $region23: #{tpu_custom_call.1} parent=11 // pred_region
          _
        $region24: #{tpu_custom_call.1} parent=11 // pred_fallthru
          _
      $region12: #{tpu_custom_call.1} parent=5 // pred_fallthru
        _
      %p166 = scmp.lt.s32.totalorder %s17, 2
      // Predicated region
      $region25: #{tpu_custom_call.1} parent=5 // pred_check
        %p167 = pneg %p166
      $region26: #{tpu_custom_call.1} parent=5 // pred_check_branch
        %169 = sbr.rel (%p167) target = $region28
      $region27: #{tpu_custom_call.1} parent=5 // pred_region
        // Predicated region
        $region29: #{tpu_custom_call.1} parent=27 // pred_check
          %p170 = pneg %p37
        $region30: #{tpu_custom_call.1} parent=27 // pred_check_branch
          %172 = sbr.rel (%p170) target = $region32
        $region31: #{tpu_custom_call.1} parent=27 // pred_region
          %s173 = sand.u32 %s27, 1
          %s174 = scalar_lea.sflag [#allocation3], %s173
          %s175 = sand.u32 %s27, 1
          %s176 = smul.addr %s175, 64
          %s177 = scalar_lea.vmem [#allocation2], %s176
          %s178 = smul.u32 8, %s17
          %s180 = ssub.s32 1024, 1024
          %181 = vsyncadd %s174, %s180
          %s182 = smul.addr %s178, 2
          %s183 = smul.addr %s182, 64
          %s184 = scalar_lea.hbm %s0, %s183
          %s185 = sshll.u32 %s177, 4
          %s186 = int_to_ptr.vmem [resolvable:$true] %s185
          %191 = dma.hbm_to_vmem [thread:$0]  %s184, 1024, %s186, %s174, 64, 64, 4
        $region32: #{tpu_custom_call.1} parent=27 // pred_fallthru
          _
      $region28: #{tpu_custom_call.1} parent=5 // pred_fallthru
        _
      %p192 = scmp.le.s32.totalorder 1, %s17
      %p193 = scmp.lt.s32.totalorder %s17, 3
      %p194 = pnand %p192, %p193
      %p195 = pneg %p194
      // Predicated region
      $region33: #{tpu_custom_call.1} parent=5 // pred_check
        _
      $region34: #{tpu_custom_call.1} parent=5 // pred_check_branch
        %197 = sbr.rel (%p194) target = $region36
      $region35: #{tpu_custom_call.1} parent=5 // pred_region
        %s198 = ssub.s32 %s17, 1
        %s199 = sand.u32 %s30, 1
        %s200 = scalar_lea.sflag [#allocation3], %s199
        %s201 = sand.u32 %s30, 1
        %s202 = smul.addr %s201, 64
        %s203 = scalar_lea.vmem [#allocation2], %s202
        // Predicated region
        $region37: #{tpu_custom_call.1} parent=35 // pred_check
          %p204 = pneg %p43
        $region38: #{tpu_custom_call.1} parent=35 // pred_check_branch
          %206 = sbr.rel (%p204) target = $region40
        $region39: #{tpu_custom_call.1} parent=35 // pred_region
          %207 = dma.done %s200, 1024
        $region40: #{tpu_custom_call.1} parent=35 // pred_fallthru
          _
        // Predicated region
        $region41: #{tpu_custom_call.1} parent=35 // pred_check
          %p208 = pneg %p64
        $region42: #{tpu_custom_call.1} parent=35 // pred_check_branch
          %210 = sbr.rel (%p208) target = $region44
        $region43: #{tpu_custom_call.1} parent=35 // pred_region
          %211 = dma.done [#allocation6], 1024
        $region44: #{tpu_custom_call.1} parent=35 // pred_fallthru
          _
        %s212 = sand.u32 %s30, 1
        %s213 = scalar_lea.sflag [#allocation3], %s212
        %s214 = sand.u32 %s30, 1
        %s215 = smul.addr %s214, 64
        %s216 = scalar_lea.vmem [#allocation2], %s215
        %p217 = pneg %p43
        %p218 = pneg %p40
        %p219 = pneg %p64
        %p220 = pneg %p61
        %p221 = pneg %p85
        %p222 = pneg %p82
        %p223 = pneg %p106
        %p224 = pneg %p103
        %p225 = pneg %p132
        %p226 = pneg %p129
        %s227 = sand.u32 %s119, 1
        %s228 = scalar_lea.sflag [#allocation4], %s227
        %s229 = sand.u32 %s119, 1
        %s230 = smul.addr %s229, 8
        %s231 = scalar_lea.vmem [#allocation7], %s230
        %s232 = smul.u32 8, %s22
        %v234 = vld [vmem:[%s203] sm:$0xf]
        %v235 = vld [vmem:[%s203 + $0x4] sm:$0xf]
        %v236 = vld [vmem:[%s203 + $0x8] sm:$0xf]
        %v237 = vld [vmem:[%s203 + $0xc] sm:$0xf]
        %v238 = vld [vmem:[%s203 + $0x10] sm:$0xf]
        %v239 = vld [vmem:[%s203 + $0x14] sm:$0xf]
        %v240 = vld [vmem:[%s203 + $0x18] sm:$0xf]
        %v241 = vld [vmem:[%s203 + $0x1c] sm:$0xf]
        %v242 = vld [vmem:[%s203 + $0x20] sm:$0xf]
        %v243 = vld [vmem:[%s203 + $0x24] sm:$0xf]
        %v244 = vld [vmem:[%s203 + $0x28] sm:$0xf]
        %v245 = vld [vmem:[%s203 + $0x2c] sm:$0xf]
        %v246 = vld [vmem:[%s203 + $0x30] sm:$0xf]
        %v247 = vld [vmem:[%s203 + $0x34] sm:$0xf]
        %v248 = vld [vmem:[%s203 + $0x38] sm:$0xf]
        %v249 = vld [vmem:[%s203 + $0x3c] sm:$0xf]
        %v250 = vld [vmem:[#allocation5] sm:$0xf]
        %v251 = vld [vmem:[#allocation5 + $0x4] sm:$0xf]
        %v252 = vld [vmem:[#allocation5 + $0x8] sm:$0xf]
        %v253 = vld [vmem:[#allocation5 + $0xc] sm:$0xf]
        %v254 = vld [vmem:[#allocation5 + $0x10] sm:$0xf]
        %v255 = vld [vmem:[#allocation5 + $0x14] sm:$0xf]
        %v256 = vld [vmem:[#allocation5 + $0x18] sm:$0xf]
        %v257 = vld [vmem:[#allocation5 + $0x1c] sm:$0xf]
        %v258 = vld [vmem:[#allocation5 + $0x20] sm:$0xf]
        %v259 = vld [vmem:[#allocation5 + $0x24] sm:$0xf]
        %v260 = vld [vmem:[#allocation5 + $0x28] sm:$0xf]
        %v261 = vld [vmem:[#allocation5 + $0x2c] sm:$0xf]
        %v262 = vld [vmem:[#allocation5 + $0x30] sm:$0xf]
        %v263 = vld [vmem:[#allocation5 + $0x34] sm:$0xf]
        %v264 = vld [vmem:[#allocation5 + $0x38] sm:$0xf]
        %v265 = vld [vmem:[#allocation5 + $0x3c] sm:$0xf]
        %v266 = vld [vmem:[%s2] sm:$0x1]
        %v268 = vlaneseq
        %v269 = vshrl.u32 %v268, 7
        %v270 = vsub.s32 0, %v269
        %v271 = vrot.slane %v266, %v270
        %v289 = vunpack.c.l.b16 %v234
        %v290 = vunpack.c.l.b16 %v235
        %v291 = vunpack.c.l.b16 %v236
        %v292 = vunpack.c.l.b16 %v237
        %v293 = vunpack.c.l.b16 %v238
        %v294 = vunpack.c.l.b16 %v239
        %v295 = vunpack.c.l.b16 %v240
        %v296 = vunpack.c.l.b16 %v241
        %v297 = vunpack.c.l.b16 %v242
        %v298 = vunpack.c.l.b16 %v243
        %v299 = vunpack.c.l.b16 %v244
        %v300 = vunpack.c.l.b16 %v245
        %v301 = vunpack.c.l.b16 %v246
        %v302 = vunpack.c.l.b16 %v247
        %v303 = vunpack.c.l.b16 %v248
        %v304 = vunpack.c.l.b16 %v249
        %v305 = vpack.c.b16 %v290, %v289
        %v306 = vpack.c.b16 %v292, %v291
        %v307 = vpack.c.b16 %v294, %v293
        %v308 = vpack.c.b16 %v296, %v295
        %v309 = vpack.c.b16 %v298, %v297
        %v310 = vpack.c.b16 %v300, %v299
        %v311 = vpack.c.b16 %v302, %v301
        %v312 = vpack.c.b16 %v304, %v303
        %v337 = vunpack.c.l.b16 %v250
        %v338 = vunpack.c.l.b16 %v251
        %v339 = vunpack.c.l.b16 %v252
        %v340 = vunpack.c.l.b16 %v253
        %v341 = vunpack.c.l.b16 %v254
        %v342 = vunpack.c.l.b16 %v255
        %v343 = vunpack.c.l.b16 %v256
        %v344 = vunpack.c.l.b16 %v257
        %v345 = vunpack.c.l.b16 %v258
        %v346 = vunpack.c.l.b16 %v259
        %v347 = vunpack.c.l.b16 %v260
        %v348 = vunpack.c.l.b16 %v261
        %v349 = vunpack.c.l.b16 %v262
        %v350 = vunpack.c.l.b16 %v263
        %v351 = vunpack.c.l.b16 %v264
        %v352 = vunpack.c.l.b16 %v265
        %v353 = vpack.c.b16 %v338, %v337
        %v354 = vpack.c.b16 %v340, %v339
        %v355 = vpack.c.b16 %v342, %v341
        %v356 = vpack.c.b16 %v344, %v343
        %v357 = vpack.c.b16 %v346, %v345
        %v358 = vpack.c.b16 %v348, %v347
        %v359 = vpack.c.b16 %v350, %v349
        %v360 = vpack.c.b16 %v352, %v351
        %369 = vmatprep.subr.bf16.mxu0 0
        %370 = vmatpush1.bf16.msra.mxu0 %v353
        %371 = vmatprep.subr.bf16.mxu0 0
        %372 = vmatpush1.bf16.msra.mxu0 %v354
        %373 = vmatprep.subr.bf16.mxu0 0
        %374 = vmatpush1.bf16.msra.mxu0 %v355
        %375 = vmatprep.subr.bf16.mxu0 0
        %376 = vmatpush1.bf16.msra.mxu0 %v356
        %377 = vmatprep.subr.bf16.mxu0 0
        %378 = vmatpush1.bf16.msra.mxu0 %v357
        %379 = vmatprep.subr.bf16.mxu0 0
        %380 = vmatpush1.bf16.msra.mxu0 %v358
        %381 = vmatprep.subr.bf16.mxu0 0
        %382 = vmatpush1.bf16.msra.mxu0 %v359
        %383 = vmatprep.subr.bf16.mxu0 0
        %384 = vmatpush1.bf16.msra.mxu0 %v360
        %385 = vmatprep.subr.bf16.mxu0 0
        %386 = vmatpush1.bf16.msra.mxu0 0
        %387 = vmatprep.subr.bf16.mxu0 0
        %388 = vmatpush1.bf16.msra.mxu0 0
        %389 = vmatprep.subr.bf16.mxu0 0
        %390 = vmatpush1.bf16.msra.mxu0 0
        %391 = vmatprep.subr.bf16.mxu0 0
        %392 = vmatpush1.bf16.msra.mxu0 0
        %393 = vmatprep.subr.bf16.mxu0 0
        %394 = vmatpush1.bf16.msra.mxu0 0
        %395 = vmatprep.subr.bf16.mxu0 0
        %396 = vmatpush1.bf16.msra.mxu0 0
        %397 = vmatprep.subr.bf16.mxu0 0
        %398 = vmatpush1.bf16.msra.mxu0 0
        %399 = vmatprep.subr.bf16.mxu0 0
        %400 = vmatpush1.bf16.msra.mxu0 0
        %401 = vmatprep.mubr.bf16.mxu0 0
        %402 = vmatmul.mubr.bf16.gmra.mrb[0].mxu0 %v305
        %v403 = vpop.f32.mrb[0].mxu0
        %v404 = vadd.f32 %v271, %v403
        %v405 = vpop.f32.mrb[0].mxu0
        %v406 = vpop.f32.mrb[0].mxu0
        %v407 = vadd.f32 %v271, %v406
        %v408 = vpop.f32.mrb[0].mxu0
        %409 = vmatprep.mubr.bf16.mxu0 0
        %410 = vmatmul.mubr.bf16.gmra.mrb[0].mxu0 %v306
        %v411 = vpop.f32.mrb[0].mxu0
        %v412 = vadd.f32 %v271, %v411
        %v413 = vpop.f32.mrb[0].mxu0
        %v414 = vpop.f32.mrb[0].mxu0
        %v415 = vadd.f32 %v271, %v414
        %v416 = vpop.f32.mrb[0].mxu0
        %417 = vmatprep.mubr.bf16.mxu0 0
        %418 = vmatmul.mubr.bf16.gmra.mrb[0].mxu0 %v307
        %v419 = vpop.f32.mrb[0].mxu0
        %v420 = vadd.f32 %v271, %v419
        %v421 = vpop.f32.mrb[0].mxu0
        %v422 = vpop.f32.mrb[0].mxu0
        %v423 = vadd.f32 %v271, %v422
        %v424 = vpop.f32.mrb[0].mxu0
        %425 = vmatprep.mubr.bf16.mxu0 0
        %426 = vmatmul.mubr.bf16.gmra.mrb[0].mxu0 %v308
        %v427 = vpop.f32.mrb[0].mxu0
        %v428 = vadd.f32 %v271, %v427
        %v429 = vpop.f32.mrb[0].mxu0
        %v430 = vpop.f32.mrb[0].mxu0
        %v431 = vadd.f32 %v271, %v430
        %v432 = vpop.f32.mrb[0].mxu0
        %433 = vmatprep.mubr.bf16.mxu0 0
        %434 = vmatmul.mubr.bf16.gmra.mrb[0].mxu0 %v309
        %v435 = vpop.f32.mrb[0].mxu0
        %v436 = vadd.f32 %v271, %v435
        %v437 = vpop.f32.mrb[0].mxu0
        %v438 = vpop.f32.mrb[0].mxu0
        %v439 = vadd.f32 %v271, %v438
        %v440 = vpop.f32.mrb[0].mxu0
        %441 = vmatprep.mubr.bf16.mxu0 0
        %442 = vmatmul.mubr.bf16.gmra.mrb[0].mxu0 %v310
        %v443 = vpop.f32.mrb[0].mxu0
        %v444 = vadd.f32 %v271, %v443
        %v445 = vpop.f32.mrb[0].mxu0
        %v446 = vpop.f32.mrb[0].mxu0
        %v447 = vadd.f32 %v271, %v446
        %v448 = vpop.f32.mrb[0].mxu0
        %449 = vmatprep.mubr.bf16.mxu0 0
        %450 = vmatmul.mubr.bf16.gmra.mrb[0].mxu0 %v311
        %v451 = vpop.f32.mrb[0].mxu0
        %v452 = vadd.f32 %v271, %v451
        %v453 = vpop.f32.mrb[0].mxu0
        %v454 = vpop.f32.mrb[0].mxu0
        %v455 = vadd.f32 %v271, %v454
        %v456 = vpop.f32.mrb[0].mxu0
        %457 = vmatprep.mubr.bf16.mxu0 0
        %458 = vmatmul.mubr.bf16.gmra.mrb[0].mxu0 %v312
        %v459 = vpop.f32.mrb[0].mxu0
        %v460 = vadd.f32 %v271, %v459
        %v461 = vpop.f32.mrb[0].mxu0
        %v462 = vpop.f32.mrb[0].mxu0
        %v463 = vadd.f32 %v271, %v462
        %v464 = vpop.f32.mrb[0].mxu0
        %465 = vdwg.mxu0
        %v466 = vtanh.pop %v404
        %v467 = vtanh.pop %v407
        %v468 = vtanh.pop %v412
        %v469 = vtanh.pop %v415
        %v470 = vtanh.pop %v420
        %v471 = vtanh.pop %v423
        %v472 = vtanh.pop %v428
        %v473 = vtanh.pop %v431
        %v474 = vtanh.pop %v436
        %v475 = vtanh.pop %v439
        %v476 = vtanh.pop %v444
        %v477 = vtanh.pop %v447
        %v478 = vtanh.pop %v452
        %v479 = vtanh.pop %v455
        %v480 = vtanh.pop %v460
        %v481 = vtanh.pop %v463
        %v482 = vld [vmem:[%s3] sm:$0x1]
        %v484 = vlaneseq
        %v485 = vshrl.u32 %v484, 7
        %v486 = vsub.s32 0, %v485
        %v487 = vrot.slane %v482, %v486
        %v489 = vmul.f32 %v466, %v487
        %v490 = vmul.f32 %v467, %v487
        %v491 = vmul.f32 %v468, %v487
        %v492 = vmul.f32 %v469, %v487
        %v493 = vmul.f32 %v470, %v487
        %v494 = vmul.f32 %v471, %v487
        %v495 = vmul.f32 %v472, %v487
        %v496 = vmul.f32 %v473, %v487
        %v497 = vmul.f32 %v474, %v487
        %v498 = vmul.f32 %v475, %v487
        %v499 = vmul.f32 %v476, %v487
        %v500 = vmul.f32 %v477, %v487
        %v501 = vmul.f32 %v478, %v487
        %v502 = vmul.f32 %v479, %v487
        %v503 = vmul.f32 %v480, %v487
        %v504 = vmul.f32 %v481, %v487
        %505 = vadd.xlane.f32.xlu0 %v489
        %v506 = vpop.xlane.xlu0 %505
        %507 = vadd.xlane.f32.xlu0 %v490
        %v508 = vpop.xlane.xlu0 %507
        %509 = vadd.xlane.f32.xlu0 %v491
        %v510 = vpop.xlane.xlu0 %509
        %511 = vadd.xlane.f32.xlu0 %v492
        %v512 = vpop.xlane.xlu0 %511
        %513 = vadd.xlane.f32.xlu0 %v493
        %v514 = vpop.xlane.xlu0 %513
        %515 = vadd.xlane.f32.xlu0 %v494
        %v516 = vpop.xlane.xlu0 %515
        %517 = vadd.xlane.f32.xlu0 %v495
        %v518 = vpop.xlane.xlu0 %517
        %519 = vadd.xlane.f32.xlu0 %v496
        %v520 = vpop.xlane.xlu0 %519
        %521 = vadd.xlane.f32.xlu0 %v497
        %v522 = vpop.xlane.xlu0 %521
        %523 = vadd.xlane.f32.xlu0 %v498
        %v524 = vpop.xlane.xlu0 %523
        %525 = vadd.xlane.f32.xlu0 %v499
        %v526 = vpop.xlane.xlu0 %525
        %527 = vadd.xlane.f32.xlu0 %v500
        %v528 = vpop.xlane.xlu0 %527
        %529 = vadd.xlane.f32.xlu0 %v501
        %v530 = vpop.xlane.xlu0 %529
        %531 = vadd.xlane.f32.xlu0 %v502
        %v532 = vpop.xlane.xlu0 %531
        %533 = vadd.xlane.f32.xlu0 %v503
        %v534 = vpop.xlane.xlu0 %533
        %535 = vadd.xlane.f32.xlu0 %v504
        %v536 = vpop.xlane.xlu0 %535
        %v553 = vlaneseq
        %v554 = vand.u32 %v553, 127
        %v555 = vlaneseq
        %v556 = vshrl.u32 %v555, 7
        %v557 = vsub.s32 %v554, %v556
        %v558 = vrot.slane %v506, %v557
        %v559 = vadd.s32 %v554, 4294967288
        %v560 = vlaneseq
        %v561 = vshrl.u32 %v560, 7
        %v562 = vsub.s32 %v559, %v561
        %v563 = vrot.slane %v508, %v562
        %vm564 = vcmask 130112
        %v565 = vsel %vm564, %v563, %v558
        %v566 = vlaneseq
        %v567 = vshrl.u32 %v566, 7
        %v568 = vsub.s32 %v554, %v567
        %v569 = vrot.slane %v510, %v568
        %v570 = vlaneseq
        %v571 = vshrl.u32 %v570, 7
        %v572 = vsub.s32 %v559, %v571
        %v573 = vrot.slane %v512, %v572
        %v574 = vsel %vm564, %v573, %v569
        %v575 = vlaneseq
        %v576 = vshrl.u32 %v575, 7
        %v577 = vsub.s32 %v554, %v576
        %v578 = vrot.slane %v514, %v577
        %v579 = vlaneseq
        %v580 = vshrl.u32 %v579, 7
        %v581 = vsub.s32 %v559, %v580
        %v582 = vrot.slane %v516, %v581
        %v583 = vsel %vm564, %v582, %v578
        %v584 = vlaneseq
        %v585 = vshrl.u32 %v584, 7
        %v586 = vsub.s32 %v554, %v585
        %v587 = vrot.slane %v518, %v586
        %v588 = vlaneseq
        %v589 = vshrl.u32 %v588, 7
        %v590 = vsub.s32 %v559, %v589
        %v591 = vrot.slane %v520, %v590
        %v592 = vsel %vm564, %v591, %v587
        %v593 = vlaneseq
        %v594 = vshrl.u32 %v593, 7
        %v595 = vsub.s32 %v554, %v594
        %v596 = vrot.slane %v522, %v595
        %v597 = vlaneseq
        %v598 = vshrl.u32 %v597, 7
        %v599 = vsub.s32 %v559, %v598
        %v600 = vrot.slane %v524, %v599
        %v601 = vsel %vm564, %v600, %v596
        %v602 = vlaneseq
        %v603 = vshrl.u32 %v602, 7
        %v604 = vsub.s32 %v554, %v603
        %v605 = vrot.slane %v526, %v604
        %v606 = vlaneseq
        %v607 = vshrl.u32 %v606, 7
        %v608 = vsub.s32 %v559, %v607
        %v609 = vrot.slane %v528, %v608
        %v610 = vsel %vm564, %v609, %v605
        %v611 = vlaneseq
        %v612 = vshrl.u32 %v611, 7
        %v613 = vsub.s32 %v554, %v612
        %v614 = vrot.slane %v530, %v613
        %v615 = vlaneseq
        %v616 = vshrl.u32 %v615, 7
        %v617 = vsub.s32 %v559, %v616
        %v618 = vrot.slane %v532, %v617
        %v619 = vsel %vm564, %v618, %v614
        %v620 = vlaneseq
        %v621 = vshrl.u32 %v620, 7
        %v622 = vsub.s32 %v554, %v621
        %v623 = vrot.slane %v534, %v622
        %v624 = vlaneseq
        %v625 = vshrl.u32 %v624, 7
        %v626 = vsub.s32 %v559, %v625
        %v627 = vrot.slane %v536, %v626
        %v628 = vsel %vm564, %v627, %v623
        %vm629 = vcmask 1041409
        %v630 = vsel %vm629, %v574, %v565
        %vm631 = vcmask 1042434
        %v632 = vsel %vm631, %v583, %v630
        %vm633 = vcmask 1043459
        %v634 = vsel %vm633, %v592, %v632
        %vm635 = vcmask 1044484
        %v636 = vsel %vm635, %v601, %v634
        %vm637 = vcmask 1045509
        %v638 = vsel %vm637, %v610, %v636
        %vm639 = vcmask 1046534
        %v640 = vsel %vm639, %v619, %v638
        %vm641 = vcmask 1047559
        %v642 = vsel %vm641, %v628, %v640
        %vm644 = vcmask 130048
        %v645 = vsel %vm644, %v642, -inf
        %646 = vmax.xlane.f32.xlu0 %v645
        %v647 = vpop.xlane.xlu0 %646
        %v649 = vlaneseq
        %v650 = vshrl.u32 %v649, 7
        %v651 = vsub.s32 0, %v650
        %v652 = vrot.slane %v647, %v651
        %v653 = vlaneseq
        %v654 = vshrl.u32 %v653, 7
        %v655 = vsub.s32 1, %v654
        %v656 = vrot.slane %v647, %v655
        %v657 = vlaneseq
        %v658 = vshrl.u32 %v657, 7
        %v659 = vsub.s32 2, %v658
        %v660 = vrot.slane %v647, %v659
        %v661 = vlaneseq
        %v662 = vshrl.u32 %v661, 7
        %v663 = vsub.s32 3, %v662
        %v664 = vrot.slane %v647, %v663
        %v665 = vlaneseq
        %v666 = vshrl.u32 %v665, 7
        %v667 = vsub.s32 4, %v666
        %v668 = vrot.slane %v647, %v667
        %v669 = vlaneseq
        %v670 = vshrl.u32 %v669, 7
        %v671 = vsub.s32 5, %v670
        %v672 = vrot.slane %v647, %v671
        %v673 = vlaneseq
        %v674 = vshrl.u32 %v673, 7
        %v675 = vsub.s32 6, %v674
        %v676 = vrot.slane %v647, %v675
        %v677 = vlaneseq
        %v678 = vshrl.u32 %v677, 7
        %v679 = vsub.s32 7, %v678
        %v680 = vrot.slane %v647, %v679
        %v689 = vsub.f32 %v506, %v652
        %v690 = vsub.f32 %v508, %v652
        %v691 = vsub.f32 %v510, %v656
        %v692 = vsub.f32 %v512, %v656
        %v693 = vsub.f32 %v514, %v660
        %v694 = vsub.f32 %v516, %v660
        %v695 = vsub.f32 %v518, %v664
        %v696 = vsub.f32 %v520, %v664
        %v697 = vsub.f32 %v522, %v668
        %v698 = vsub.f32 %v524, %v668
        %v699 = vsub.f32 %v526, %v672
        %v700 = vsub.f32 %v528, %v672
        %v701 = vsub.f32 %v530, %v676
        %v702 = vsub.f32 %v532, %v676
        %v703 = vsub.f32 %v534, %v680
        %v704 = vsub.f32 %v536, %v680
        %v705 = vmul.f32 %v689, 1.442695
        %v706 = vpow.pop %v705
        %v707 = vmul.f32 %v690, 1.442695
        %v708 = vpow.pop %v707
        %v709 = vmul.f32 %v691, 1.442695
        %v710 = vpow.pop %v709
        %v711 = vmul.f32 %v692, 1.442695
        %v712 = vpow.pop %v711
        %v713 = vmul.f32 %v693, 1.442695
        %v714 = vpow.pop %v713
        %v715 = vmul.f32 %v694, 1.442695
        %v716 = vpow.pop %v715
        %v717 = vmul.f32 %v695, 1.442695
        %v718 = vpow.pop %v717
        %v719 = vmul.f32 %v696, 1.442695
        %v720 = vpow.pop %v719
        %v721 = vmul.f32 %v697, 1.442695
        %v722 = vpow.pop %v721
        %v723 = vmul.f32 %v698, 1.442695
        %v724 = vpow.pop %v723
        %v725 = vmul.f32 %v699, 1.442695
        %v726 = vpow.pop %v725
        %v727 = vmul.f32 %v700, 1.442695
        %v728 = vpow.pop %v727
        %v729 = vmul.f32 %v701, 1.442695
        %v730 = vpow.pop %v729
        %v731 = vmul.f32 %v702, 1.442695
        %v732 = vpow.pop %v731
        %v733 = vmul.f32 %v703, 1.442695
        %v734 = vpow.pop %v733
        %v735 = vmul.f32 %v704, 1.442695
        %v736 = vpow.pop %v735
        %753 = vset.pattern.permute.xlu0 0
        %754 = vperm.xlu0 %753, %v706
        %v755 = vpop.permute.xlu0 %754
        %756 = vset.pattern.permute.xlu0 0
        %757 = vperm.xlu0 %756, %v708
        %v758 = vpop.permute.xlu0 %757
        %759 = vset.pattern.permute.xlu0 0
        %760 = vperm.xlu0 %759, %v710
        %v761 = vpop.permute.xlu0 %760
        %762 = vset.pattern.permute.xlu0 0
        %763 = vperm.xlu0 %762, %v712
        %v764 = vpop.permute.xlu0 %763
        %765 = vset.pattern.permute.xlu0 0
        %766 = vperm.xlu0 %765, %v714
        %v767 = vpop.permute.xlu0 %766
        %768 = vset.pattern.permute.xlu0 0
        %769 = vperm.xlu0 %768, %v716
        %v770 = vpop.permute.xlu0 %769
        %771 = vset.pattern.permute.xlu0 0
        %772 = vperm.xlu0 %771, %v718
        %v773 = vpop.permute.xlu0 %772
        %774 = vset.pattern.permute.xlu0 0
        %775 = vperm.xlu0 %774, %v720
        %v776 = vpop.permute.xlu0 %775
        %777 = vset.pattern.permute.xlu0 0
        %778 = vperm.xlu0 %777, %v722
        %v779 = vpop.permute.xlu0 %778
        %780 = vset.pattern.permute.xlu0 0
        %781 = vperm.xlu0 %780, %v724
        %v782 = vpop.permute.xlu0 %781
        %783 = vset.pattern.permute.xlu0 0
        %784 = vperm.xlu0 %783, %v726
        %v785 = vpop.permute.xlu0 %784
        %786 = vset.pattern.permute.xlu0 0
        %787 = vperm.xlu0 %786, %v728
        %v788 = vpop.permute.xlu0 %787
        %789 = vset.pattern.permute.xlu0 0
        %790 = vperm.xlu0 %789, %v730
        %v791 = vpop.permute.xlu0 %790
        %792 = vset.pattern.permute.xlu0 0
        %793 = vperm.xlu0 %792, %v732
        %v794 = vpop.permute.xlu0 %793
        %795 = vset.pattern.permute.xlu0 0
        %796 = vperm.xlu0 %795, %v734
        %v797 = vpop.permute.xlu0 %796
        %798 = vset.pattern.permute.xlu0 0
        %799 = vperm.xlu0 %798, %v736
        %v800 = vpop.permute.xlu0 %799
        %v801 = vlaneseq
        %v802 = vshrl.u32 %v801, 7
        %v803 = vsub.s32 %v554, %v802
        %v804 = vrot.slane %v755, %v803
        %v805 = vlaneseq
        %v806 = vshrl.u32 %v805, 7
        %v807 = vsub.s32 %v559, %v806
        %v808 = vrot.slane %v758, %v807
        %v809 = vsel %vm564, %v808, %v804
        %v810 = vlaneseq
        %v811 = vshrl.u32 %v810, 7
        %v812 = vsub.s32 %v554, %v811
        %v813 = vrot.slane %v761, %v812
        %v814 = vlaneseq
        %v815 = vshrl.u32 %v814, 7
        %v816 = vsub.s32 %v559, %v815
        %v817 = vrot.slane %v764, %v816
        %v818 = vsel %vm564, %v817, %v813
        %v819 = vlaneseq
        %v820 = vshrl.u32 %v819, 7
        %v821 = vsub.s32 %v554, %v820
        %v822 = vrot.slane %v767, %v821
        %v823 = vlaneseq
        %v824 = vshrl.u32 %v823, 7
        %v825 = vsub.s32 %v559, %v824
        %v826 = vrot.slane %v770, %v825
        %v827 = vsel %vm564, %v826, %v822
        %v828 = vlaneseq
        %v829 = vshrl.u32 %v828, 7
        %v830 = vsub.s32 %v554, %v829
        %v831 = vrot.slane %v773, %v830
        %v832 = vlaneseq
        %v833 = vshrl.u32 %v832, 7
        %v834 = vsub.s32 %v559, %v833
        %v835 = vrot.slane %v776, %v834
        %v836 = vsel %vm564, %v835, %v831
        %v837 = vlaneseq
        %v838 = vshrl.u32 %v837, 7
        %v839 = vsub.s32 %v554, %v838
        %v840 = vrot.slane %v779, %v839
        %v841 = vlaneseq
        %v842 = vshrl.u32 %v841, 7
        %v843 = vsub.s32 %v559, %v842
        %v844 = vrot.slane %v782, %v843
        %v845 = vsel %vm564, %v844, %v840
        %v846 = vlaneseq
        %v847 = vshrl.u32 %v846, 7
        %v848 = vsub.s32 %v554, %v847
        %v849 = vrot.slane %v785, %v848
        %v850 = vlaneseq
        %v851 = vshrl.u32 %v850, 7
        %v852 = vsub.s32 %v559, %v851
        %v853 = vrot.slane %v788, %v852
        %v854 = vsel %vm564, %v853, %v849
        %v855 = vlaneseq
        %v856 = vshrl.u32 %v855, 7
        %v857 = vsub.s32 %v554, %v856
        %v858 = vrot.slane %v791, %v857
        %v859 = vlaneseq
        %v860 = vshrl.u32 %v859, 7
        %v861 = vsub.s32 %v559, %v860
        %v862 = vrot.slane %v794, %v861
        %v863 = vsel %vm564, %v862, %v858
        %v864 = vlaneseq
        %v865 = vshrl.u32 %v864, 7
        %v866 = vsub.s32 %v554, %v865
        %v867 = vrot.slane %v797, %v866
        %v868 = vlaneseq
        %v869 = vshrl.u32 %v868, 7
        %v870 = vsub.s32 %v559, %v869
        %v871 = vrot.slane %v800, %v870
        %v872 = vsel %vm564, %v871, %v867
        %v873 = vsel %vm629, %v818, %v809
        %v874 = vsel %vm631, %v827, %v873
        %v875 = vsel %vm633, %v836, %v874
        %v876 = vsel %vm635, %v845, %v875
        %v877 = vsel %vm637, %v854, %v876
        %v878 = vsel %vm639, %v863, %v877
        %v879 = vsel %vm641, %v872, %v878
        %v881 = vsel %vm644, %v879, 0.0
        %882 = vadd.xlane.f32.xlu0 %v881
        %v883 = vpop.xlane.xlu0 %882
        %v884 = vpack.c.bf16 %v708, %v706
        %v885 = vpack.c.bf16 %v712, %v710
        %v886 = vpack.c.bf16 %v716, %v714
        %v887 = vpack.c.bf16 %v720, %v718
        %v888 = vpack.c.bf16 %v724, %v722
        %v889 = vpack.c.bf16 %v728, %v726
        %v890 = vpack.c.bf16 %v732, %v730
        %v891 = vpack.c.bf16 %v736, %v734
        %v893 = vunpack.c.l.b16 %v884
        %v894 = vunpack.c.h.b16 %v884
        %895 = vset.pattern.permute.xlu0 0
        %896 = vperm.xlu0 %895, %v893
        %v897 = vpop.permute.xlu0 %896
        %898 = vset.pattern.permute.xlu0 0
        %899 = vperm.xlu0 %898, %v894
        %v900 = vpop.permute.xlu0 %899
        %v901 = vlaneseq
        %v902 = vshrl.u32 %v901, 7
        %v903 = vsub.s32 %v554, %v902
        %v904 = vrot.slane %v897, %v903
        %v905 = vlaneseq
        %v906 = vshrl.u32 %v905, 7
        %v907 = vsub.s32 %v559, %v906
        %v908 = vrot.slane %v900, %v907
        %v909 = vsel %vm564, %v908, %v904
        %v910 = vpack.c.b16 %v909, %v909
        %v912 = vsel %vm644, %v910, 0
        %914 = vmatprep.subr.bf16.mxu0 0
        %915 = vmatpush1.bf16.msra.mxu0 %v305
        %916 = vmatprep.subr.bf16.mxu0 0
        %917 = vmatpush1.bf16.msra.mxu0 0
        %918 = vmatprep.subr.bf16.mxu0 0
        %919 = vmatpush1.bf16.msra.mxu0 0
        %920 = vmatprep.subr.bf16.mxu0 0
        %921 = vmatpush1.bf16.msra.mxu0 0
        %922 = vmatprep.subr.bf16.mxu0 0
        %923 = vmatpush1.bf16.msra.mxu0 0
        %924 = vmatprep.subr.bf16.mxu0 0
        %925 = vmatpush1.bf16.msra.mxu0 0
        %926 = vmatprep.subr.bf16.mxu0 0
        %927 = vmatpush1.bf16.msra.mxu0 0
        %928 = vmatprep.subr.bf16.mxu0 0
        %929 = vmatpush1.bf16.msra.mxu0 0
        %930 = vmatprep.subr.bf16.mxu0 0
        %931 = vmatpush1.bf16.msra.mxu0 0
        %932 = vmatprep.subr.bf16.mxu0 0
        %933 = vmatpush1.bf16.msra.mxu0 0
        %934 = vmatprep.subr.bf16.mxu0 0
        %935 = vmatpush1.bf16.msra.mxu0 0
        %936 = vmatprep.subr.bf16.mxu0 0
        %937 = vmatpush1.bf16.msra.mxu0 0
        %938 = vmatprep.subr.bf16.mxu0 0
        %939 = vmatpush1.bf16.msra.mxu0 0
        %940 = vmatprep.subr.bf16.mxu0 0
        %941 = vmatpush1.bf16.msra.mxu0 0
        %942 = vmatprep.subr.bf16.mxu0 0
        %943 = vmatpush1.bf16.msra.mxu0 0
        %944 = vmatprep.subr.bf16.mxu0 0
        %945 = vmatpush1.bf16.msra.mxu0 0
        %946 = vmatprep.mubr.bf16.mxu0 0
        %947 = vmatmul.mubr.bf16.gmra.mrb[0].mxu0 %v912
        %v948 = vpop.f32.mrb[0].mxu0
        %v949 = vadd.f32 0.0, %v948
        %v950 = vpop.f32.mrb[0].mxu0
        %v951 = vpop.f32.mrb[0].mxu0
        %v952 = vpop.f32.mrb[0].mxu0
        %953 = vdwg.mxu0
        %v955 = vunpack.c.l.b16 %v885
        %v956 = vunpack.c.h.b16 %v885
        %957 = vset.pattern.permute.xlu0 0
        %958 = vperm.xlu0 %957, %v955
        %v959 = vpop.permute.xlu0 %958
        %960 = vset.pattern.permute.xlu0 0
        %961 = vperm.xlu0 %960, %v956
        %v962 = vpop.permute.xlu0 %961
        %v963 = vlaneseq
        %v964 = vshrl.u32 %v963, 7
        %v965 = vsub.s32 %v554, %v964
        %v966 = vrot.slane %v959, %v965
        %v967 = vlaneseq
        %v968 = vshrl.u32 %v967, 7
        %v969 = vsub.s32 %v559, %v968
        %v970 = vrot.slane %v962, %v969
        %v971 = vsel %vm564, %v970, %v966
        %v972 = vpack.c.b16 %v971, %v971
        %v974 = vsel %vm644, %v972, 0
        %976 = vmatprep.subr.bf16.mxu0 0
        %977 = vmatpush1.bf16.msra.mxu0 %v306
        %978 = vmatprep.subr.bf16.mxu0 0
        %979 = vmatpush1.bf16.msra.mxu0 0
        %980 = vmatprep.subr.bf16.mxu0 0
        %981 = vmatpush1.bf16.msra.mxu0 0
        %982 = vmatprep.subr.bf16.mxu0 0
        %983 = vmatpush1.bf16.msra.mxu0 0
        %984 = vmatprep.subr.bf16.mxu0 0
        %985 = vmatpush1.bf16.msra.mxu0 0
        %986 = vmatprep.subr.bf16.mxu0 0
        %987 = vmatpush1.bf16.msra.mxu0 0
        %988 = vmatprep.subr.bf16.mxu0 0
        %989 = vmatpush1.bf16.msra.mxu0 0
        %990 = vmatprep.subr.bf16.mxu0 0
        %991 = vmatpush1.bf16.msra.mxu0 0
        %992 = vmatprep.subr.bf16.mxu0 0
        %993 = vmatpush1.bf16.msra.mxu0 0
        %994 = vmatprep.subr.bf16.mxu0 0
        %995 = vmatpush1.bf16.msra.mxu0 0
        %996 = vmatprep.subr.bf16.mxu0 0
        %997 = vmatpush1.bf16.msra.mxu0 0
        %998 = vmatprep.subr.bf16.mxu0 0
        %999 = vmatpush1.bf16.msra.mxu0 0
        %1000 = vmatprep.subr.bf16.mxu0 0
        %1001 = vmatpush1.bf16.msra.mxu0 0
        %1002 = vmatprep.subr.bf16.mxu0 0
        %1003 = vmatpush1.bf16.msra.mxu0 0
        %1004 = vmatprep.subr.bf16.mxu0 0
        %1005 = vmatpush1.bf16.msra.mxu0 0
        %1006 = vmatprep.subr.bf16.mxu0 0
        %1007 = vmatpush1.bf16.msra.mxu0 0
        %1008 = vmatprep.mubr.bf16.mxu0 0
        %1009 = vmatmul.mubr.bf16.gmra.mrb[0].mxu0 %v974
        %v1010 = vpop.f32.mrb[0].mxu0
        %v1011 = vadd.f32 0.0, %v1010
        %v1012 = vpop.f32.mrb[0].mxu0
        %v1013 = vpop.f32.mrb[0].mxu0
        %v1014 = vpop.f32.mrb[0].mxu0
        %1015 = vdwg.mxu0
        %v1017 = vunpack.c.l.b16 %v886
        %v1018 = vunpack.c.h.b16 %v886
        %1019 = vset.pattern.permute.xlu0 0
        %1020 = vperm.xlu0 %1019, %v1017
        %v1021 = vpop.permute.xlu0 %1020
        %1022 = vset.pattern.permute.xlu0 0
        %1023 = vperm.xlu0 %1022, %v1018
        %v1024 = vpop.permute.xlu0 %1023
        %v1025 = vlaneseq
        %v1026 = vshrl.u32 %v1025, 7
        %v1027 = vsub.s32 %v554, %v1026
        %v1028 = vrot.slane %v1021, %v1027
        %v1029 = vlaneseq
        %v1030 = vshrl.u32 %v1029, 7
        %v1031 = vsub.s32 %v559, %v1030
        %v1032 = vrot.slane %v1024, %v1031
        %v1033 = vsel %vm564, %v1032, %v1028
        %v1034 = vpack.c.b16 %v1033, %v1033
        %v1036 = vsel %vm644, %v1034, 0
        %1038 = vmatprep.subr.bf16.mxu0 0
        %1039 = vmatpush1.bf16.msra.mxu0 %v307
        %1040 = vmatprep.subr.bf16.mxu0 0
        %1041 = vmatpush1.bf16.msra.mxu0 0
        %1042 = vmatprep.subr.bf16.mxu0 0
        %1043 = vmatpush1.bf16.msra.mxu0 0
        %1044 = vmatprep.subr.bf16.mxu0 0
        %1045 = vmatpush1.bf16.msra.mxu0 0
        %1046 = vmatprep.subr.bf16.mxu0 0
        %1047 = vmatpush1.bf16.msra.mxu0 0
        %1048 = vmatprep.subr.bf16.mxu0 0
        %1049 = vmatpush1.bf16.msra.mxu0 0
        %1050 = vmatprep.subr.bf16.mxu0 0
        %1051 = vmatpush1.bf16.msra.mxu0 0
        %1052 = vmatprep.subr.bf16.mxu0 0
        %1053 = vmatpush1.bf16.msra.mxu0 0
        %1054 = vmatprep.subr.bf16.mxu0 0
        %1055 = vmatpush1.bf16.msra.mxu0 0
        %1056 = vmatprep.subr.bf16.mxu0 0
        %1057 = vmatpush1.bf16.msra.mxu0 0
        %1058 = vmatprep.subr.bf16.mxu0 0
        %1059 = vmatpush1.bf16.msra.mxu0 0
        %1060 = vmatprep.subr.bf16.mxu0 0
        %1061 = vmatpush1.bf16.msra.mxu0 0
        %1062 = vmatprep.subr.bf16.mxu0 0
        %1063 = vmatpush1.bf16.msra.mxu0 0
        %1064 = vmatprep.subr.bf16.mxu0 0
        %1065 = vmatpush1.bf16.msra.mxu0 0
        %1066 = vmatprep.subr.bf16.mxu0 0
        %1067 = vmatpush1.bf16.msra.mxu0 0
        %1068 = vmatprep.subr.bf16.mxu0 0
        %1069 = vmatpush1.bf16.msra.mxu0 0
        %1070 = vmatprep.mubr.bf16.mxu0 0
        %1071 = vmatmul.mubr.bf16.gmra.mrb[0].mxu0 %v1036
        %v1072 = vpop.f32.mrb[0].mxu0
        %v1073 = vadd.f32 0.0, %v1072
        %v1074 = vpop.f32.mrb[0].mxu0
        %v1075 = vpop.f32.mrb[0].mxu0
        %v1076 = vpop.f32.mrb[0].mxu0
        %1077 = vdwg.mxu0
        %v1079 = vunpack.c.l.b16 %v887
        %v1080 = vunpack.c.h.b16 %v887
        %1081 = vset.pattern.permute.xlu0 0
        %1082 = vperm.xlu0 %1081, %v1079
        %v1083 = vpop.permute.xlu0 %1082
        %1084 = vset.pattern.permute.xlu0 0
        %1085 = vperm.xlu0 %1084, %v1080
        %v1086 = vpop.permute.xlu0 %1085
        %v1087 = vlaneseq
        %v1088 = vshrl.u32 %v1087, 7
        %v1089 = vsub.s32 %v554, %v1088
        %v1090 = vrot.slane %v1083, %v1089
        %v1091 = vlaneseq
        %v1092 = vshrl.u32 %v1091, 7
        %v1093 = vsub.s32 %v559, %v1092
        %v1094 = vrot.slane %v1086, %v1093
        %v1095 = vsel %vm564, %v1094, %v1090
        %v1096 = vpack.c.b16 %v1095, %v1095
        %v1098 = vsel %vm644, %v1096, 0
        %1100 = vmatprep.subr.bf16.mxu0 0
        %1101 = vmatpush1.bf16.msra.mxu0 %v308
        %1102 = vmatprep.subr.bf16.mxu0 0
        %1103 = vmatpush1.bf16.msra.mxu0 0
        %1104 = vmatprep.subr.bf16.mxu0 0
        %1105 = vmatpush1.bf16.msra.mxu0 0
        %1106 = vmatprep.subr.bf16.mxu0 0
        %1107 = vmatpush1.bf16.msra.mxu0 0
        %1108 = vmatprep.subr.bf16.mxu0 0
        %1109 = vmatpush1.bf16.msra.mxu0 0
        %1110 = vmatprep.subr.bf16.mxu0 0
        %1111 = vmatpush1.bf16.msra.mxu0 0
        %1112 = vmatprep.subr.bf16.mxu0 0
        %1113 = vmatpush1.bf16.msra.mxu0 0
        %1114 = vmatprep.subr.bf16.mxu0 0
        %1115 = vmatpush1.bf16.msra.mxu0 0
        %1116 = vmatprep.subr.bf16.mxu0 0
        %1117 = vmatpush1.bf16.msra.mxu0 0
        %1118 = vmatprep.subr.bf16.mxu0 0
        %1119 = vmatpush1.bf16.msra.mxu0 0
        %1120 = vmatprep.subr.bf16.mxu0 0
        %1121 = vmatpush1.bf16.msra.mxu0 0
        %1122 = vmatprep.subr.bf16.mxu0 0
        %1123 = vmatpush1.bf16.msra.mxu0 0
        %1124 = vmatprep.subr.bf16.mxu0 0
        %1125 = vmatpush1.bf16.msra.mxu0 0
        %1126 = vmatprep.subr.bf16.mxu0 0
        %1127 = vmatpush1.bf16.msra.mxu0 0
        %1128 = vmatprep.subr.bf16.mxu0 0
        %1129 = vmatpush1.bf16.msra.mxu0 0
        %1130 = vmatprep.subr.bf16.mxu0 0
        %1131 = vmatpush1.bf16.msra.mxu0 0
        %1132 = vmatprep.mubr.bf16.mxu0 0
        %1133 = vmatmul.mubr.bf16.gmra.mrb[0].mxu0 %v1098
        %v1134 = vpop.f32.mrb[0].mxu0
        %v1135 = vadd.f32 0.0, %v1134
        %v1136 = vpop.f32.mrb[0].mxu0
        %v1137 = vpop.f32.mrb[0].mxu0
        %v1138 = vpop.f32.mrb[0].mxu0
        %1139 = vdwg.mxu0
        %v1141 = vunpack.c.l.b16 %v888
        %v1142 = vunpack.c.h.b16 %v888
        %1143 = vset.pattern.permute.xlu0 0
        %1144 = vperm.xlu0 %1143, %v1141
        %v1145 = vpop.permute.xlu0 %1144
        %1146 = vset.pattern.permute.xlu0 0
        %1147 = vperm.xlu0 %1146, %v1142
        %v1148 = vpop.permute.xlu0 %1147
        %v1149 = vlaneseq
        %v1150 = vshrl.u32 %v1149, 7
        %v1151 = vsub.s32 %v554, %v1150
        %v1152 = vrot.slane %v1145, %v1151
        %v1153 = vlaneseq
        %v1154 = vshrl.u32 %v1153, 7
        %v1155 = vsub.s32 %v559, %v1154
        %v1156 = vrot.slane %v1148, %v1155
        %v1157 = vsel %vm564, %v1156, %v1152
        %v1158 = vpack.c.b16 %v1157, %v1157
        %v1160 = vsel %vm644, %v1158, 0
        %1162 = vmatprep.subr.bf16.mxu0 0
        %1163 = vmatpush1.bf16.msra.mxu0 %v309
        %1164 = vmatprep.subr.bf16.mxu0 0
        %1165 = vmatpush1.bf16.msra.mxu0 0
        %1166 = vmatprep.subr.bf16.mxu0 0
        %1167 = vmatpush1.bf16.msra.mxu0 0
        %1168 = vmatprep.subr.bf16.mxu0 0
        %1169 = vmatpush1.bf16.msra.mxu0 0
        %1170 = vmatprep.subr.bf16.mxu0 0
        %1171 = vmatpush1.bf16.msra.mxu0 0
        %1172 = vmatprep.subr.bf16.mxu0 0
        %1173 = vmatpush1.bf16.msra.mxu0 0
        %1174 = vmatprep.subr.bf16.mxu0 0
        %1175 = vmatpush1.bf16.msra.mxu0 0
        %1176 = vmatprep.subr.bf16.mxu0 0
        %1177 = vmatpush1.bf16.msra.mxu0 0
        %1178 = vmatprep.subr.bf16.mxu0 0
        %1179 = vmatpush1.bf16.msra.mxu0 0
        %1180 = vmatprep.subr.bf16.mxu0 0
        %1181 = vmatpush1.bf16.msra.mxu0 0
        %1182 = vmatprep.subr.bf16.mxu0 0
        %1183 = vmatpush1.bf16.msra.mxu0 0
        %1184 = vmatprep.subr.bf16.mxu0 0
        %1185 = vmatpush1.bf16.msra.mxu0 0
        %1186 = vmatprep.subr.bf16.mxu0 0
        %1187 = vmatpush1.bf16.msra.mxu0 0
        %1188 = vmatprep.subr.bf16.mxu0 0
        %1189 = vmatpush1.bf16.msra.mxu0 0
        %1190 = vmatprep.subr.bf16.mxu0 0
        %1191 = vmatpush1.bf16.msra.mxu0 0
        %1192 = vmatprep.subr.bf16.mxu0 0
        %1193 = vmatpush1.bf16.msra.mxu0 0
        %1194 = vmatprep.mubr.bf16.mxu0 0
        %1195 = vmatmul.mubr.bf16.gmra.mrb[0].mxu0 %v1160
        %v1196 = vpop.f32.mrb[0].mxu0
        %v1197 = vadd.f32 0.0, %v1196
        %v1198 = vpop.f32.mrb[0].mxu0
        %v1199 = vpop.f32.mrb[0].mxu0
        %v1200 = vpop.f32.mrb[0].mxu0
        %1201 = vdwg.mxu0
        %v1203 = vunpack.c.l.b16 %v889
        %v1204 = vunpack.c.h.b16 %v889
        %1205 = vset.pattern.permute.xlu0 0
        %1206 = vperm.xlu0 %1205, %v1203
        %v1207 = vpop.permute.xlu0 %1206
        %1208 = vset.pattern.permute.xlu0 0
        %1209 = vperm.xlu0 %1208, %v1204
        %v1210 = vpop.permute.xlu0 %1209
        %v1211 = vlaneseq
        %v1212 = vshrl.u32 %v1211, 7
        %v1213 = vsub.s32 %v554, %v1212
        %v1214 = vrot.slane %v1207, %v1213
        %v1215 = vlaneseq
        %v1216 = vshrl.u32 %v1215, 7
        %v1217 = vsub.s32 %v559, %v1216
        %v1218 = vrot.slane %v1210, %v1217
        %v1219 = vsel %vm564, %v1218, %v1214
        %v1220 = vpack.c.b16 %v1219, %v1219
        %v1222 = vsel %vm644, %v1220, 0
        %1224 = vmatprep.subr.bf16.mxu0 0
        %1225 = vmatpush1.bf16.msra.mxu0 %v310
        %1226 = vmatprep.subr.bf16.mxu0 0
        %1227 = vmatpush1.bf16.msra.mxu0 0
        %1228 = vmatprep.subr.bf16.mxu0 0
        %1229 = vmatpush1.bf16.msra.mxu0 0
        %1230 = vmatprep.subr.bf16.mxu0 0
        %1231 = vmatpush1.bf16.msra.mxu0 0
        %1232 = vmatprep.subr.bf16.mxu0 0
        %1233 = vmatpush1.bf16.msra.mxu0 0
        %1234 = vmatprep.subr.bf16.mxu0 0
        %1235 = vmatpush1.bf16.msra.mxu0 0
        %1236 = vmatprep.subr.bf16.mxu0 0
        %1237 = vmatpush1.bf16.msra.mxu0 0
        %1238 = vmatprep.subr.bf16.mxu0 0
        %1239 = vmatpush1.bf16.msra.mxu0 0
        %1240 = vmatprep.subr.bf16.mxu0 0
        %1241 = vmatpush1.bf16.msra.mxu0 0
        %1242 = vmatprep.subr.bf16.mxu0 0
        %1243 = vmatpush1.bf16.msra.mxu0 0
        %1244 = vmatprep.subr.bf16.mxu0 0
        %1245 = vmatpush1.bf16.msra.mxu0 0
        %1246 = vmatprep.subr.bf16.mxu0 0
        %1247 = vmatpush1.bf16.msra.mxu0 0
        %1248 = vmatprep.subr.bf16.mxu0 0
        %1249 = vmatpush1.bf16.msra.mxu0 0
        %1250 = vmatprep.subr.bf16.mxu0 0
        %1251 = vmatpush1.bf16.msra.mxu0 0
        %1252 = vmatprep.subr.bf16.mxu0 0
        %1253 = vmatpush1.bf16.msra.mxu0 0
        %1254 = vmatprep.subr.bf16.mxu0 0
        %1255 = vmatpush1.bf16.msra.mxu0 0
        %1256 = vmatprep.mubr.bf16.mxu0 0
        %1257 = vmatmul.mubr.bf16.gmra.mrb[0].mxu0 %v1222
        %v1258 = vpop.f32.mrb[0].mxu0
        %v1259 = vadd.f32 0.0, %v1258
        %v1260 = vpop.f32.mrb[0].mxu0
        %v1261 = vpop.f32.mrb[0].mxu0
        %v1262 = vpop.f32.mrb[0].mxu0
        %1263 = vdwg.mxu0
        %v1265 = vunpack.c.l.b16 %v890
        %v1266 = vunpack.c.h.b16 %v890
        %1267 = vset.pattern.permute.xlu0 0
        %1268 = vperm.xlu0 %1267, %v1265
        %v1269 = vpop.permute.xlu0 %1268
        %1270 = vset.pattern.permute.xlu0 0
        %1271 = vperm.xlu0 %1270, %v1266
        %v1272 = vpop.permute.xlu0 %1271
        %v1273 = vlaneseq
        %v1274 = vshrl.u32 %v1273, 7
        %v1275 = vsub.s32 %v554, %v1274
        %v1276 = vrot.slane %v1269, %v1275
        %v1277 = vlaneseq
        %v1278 = vshrl.u32 %v1277, 7
        %v1279 = vsub.s32 %v559, %v1278
        %v1280 = vrot.slane %v1272, %v1279
        %v1281 = vsel %vm564, %v1280, %v1276
        %v1282 = vpack.c.b16 %v1281, %v1281
        %v1284 = vsel %vm644, %v1282, 0
        %1286 = vmatprep.subr.bf16.mxu0 0
        %1287 = vmatpush1.bf16.msra.mxu0 %v311
        %1288 = vmatprep.subr.bf16.mxu0 0
        %1289 = vmatpush1.bf16.msra.mxu0 0
        %1290 = vmatprep.subr.bf16.mxu0 0
        %1291 = vmatpush1.bf16.msra.mxu0 0
        %1292 = vmatprep.subr.bf16.mxu0 0
        %1293 = vmatpush1.bf16.msra.mxu0 0
        %1294 = vmatprep.subr.bf16.mxu0 0
        %1295 = vmatpush1.bf16.msra.mxu0 0
        %1296 = vmatprep.subr.bf16.mxu0 0
        %1297 = vmatpush1.bf16.msra.mxu0 0
        %1298 = vmatprep.subr.bf16.mxu0 0
        %1299 = vmatpush1.bf16.msra.mxu0 0
        %1300 = vmatprep.subr.bf16.mxu0 0
        %1301 = vmatpush1.bf16.msra.mxu0 0
        %1302 = vmatprep.subr.bf16.mxu0 0
        %1303 = vmatpush1.bf16.msra.mxu0 0
        %1304 = vmatprep.subr.bf16.mxu0 0
        %1305 = vmatpush1.bf16.msra.mxu0 0
        %1306 = vmatprep.subr.bf16.mxu0 0
        %1307 = vmatpush1.bf16.msra.mxu0 0
        %1308 = vmatprep.subr.bf16.mxu0 0
        %1309 = vmatpush1.bf16.msra.mxu0 0
        %1310 = vmatprep.subr.bf16.mxu0 0
        %1311 = vmatpush1.bf16.msra.mxu0 0
        %1312 = vmatprep.subr.bf16.mxu0 0
        %1313 = vmatpush1.bf16.msra.mxu0 0
        %1314 = vmatprep.subr.bf16.mxu0 0
        %1315 = vmatpush1.bf16.msra.mxu0 0
        %1316 = vmatprep.subr.bf16.mxu0 0
        %1317 = vmatpush1.bf16.msra.mxu0 0
        %1318 = vmatprep.mubr.bf16.mxu0 0
        %1319 = vmatmul.mubr.bf16.gmra.mrb[0].mxu0 %v1284
        %v1320 = vpop.f32.mrb[0].mxu0
        %v1321 = vadd.f32 0.0, %v1320
        %v1322 = vpop.f32.mrb[0].mxu0
        %v1323 = vpop.f32.mrb[0].mxu0
        %v1324 = vpop.f32.mrb[0].mxu0
        %1325 = vdwg.mxu0
        %v1327 = vunpack.c.l.b16 %v891
        %v1328 = vunpack.c.h.b16 %v891
        %1329 = vset.pattern.permute.xlu0 0
        %1330 = vperm.xlu0 %1329, %v1327
        %v1331 = vpop.permute.xlu0 %1330
        %1332 = vset.pattern.permute.xlu0 0
        %1333 = vperm.xlu0 %1332, %v1328
        %v1334 = vpop.permute.xlu0 %1333
        %v1335 = vlaneseq
        %v1336 = vshrl.u32 %v1335, 7
        %v1337 = vsub.s32 %v554, %v1336
        %v1338 = vrot.slane %v1331, %v1337
        %v1339 = vlaneseq
        %v1340 = vshrl.u32 %v1339, 7
        %v1341 = vsub.s32 %v559, %v1340
        %v1342 = vrot.slane %v1334, %v1341
        %v1343 = vsel %vm564, %v1342, %v1338
        %v1344 = vpack.c.b16 %v1343, %v1343
        %v1346 = vsel %vm644, %v1344, 0
        %1348 = vmatprep.subr.bf16.mxu0 0
        %1349 = vmatpush1.bf16.msra.mxu0 %v312
        %1350 = vmatprep.subr.bf16.mxu0 0
        %1351 = vmatpush1.bf16.msra.mxu0 0
        %1352 = vmatprep.subr.bf16.mxu0 0
        %1353 = vmatpush1.bf16.msra.mxu0 0
        %1354 = vmatprep.subr.bf16.mxu0 0
        %1355 = vmatpush1.bf16.msra.mxu0 0
        %1356 = vmatprep.subr.bf16.mxu0 0
        %1357 = vmatpush1.bf16.msra.mxu0 0
        %1358 = vmatprep.subr.bf16.mxu0 0
        %1359 = vmatpush1.bf16.msra.mxu0 0
        %1360 = vmatprep.subr.bf16.mxu0 0
        %1361 = vmatpush1.bf16.msra.mxu0 0
        %1362 = vmatprep.subr.bf16.mxu0 0
        %1363 = vmatpush1.bf16.msra.mxu0 0
        %1364 = vmatprep.subr.bf16.mxu0 0
        %1365 = vmatpush1.bf16.msra.mxu0 0
        %1366 = vmatprep.subr.bf16.mxu0 0
        %1367 = vmatpush1.bf16.msra.mxu0 0
        %1368 = vmatprep.subr.bf16.mxu0 0
        %1369 = vmatpush1.bf16.msra.mxu0 0
        %1370 = vmatprep.subr.bf16.mxu0 0
        %1371 = vmatpush1.bf16.msra.mxu0 0
        %1372 = vmatprep.subr.bf16.mxu0 0
        %1373 = vmatpush1.bf16.msra.mxu0 0
        %1374 = vmatprep.subr.bf16.mxu0 0
        %1375 = vmatpush1.bf16.msra.mxu0 0
        %1376 = vmatprep.subr.bf16.mxu0 0
        %1377 = vmatpush1.bf16.msra.mxu0 0
        %1378 = vmatprep.subr.bf16.mxu0 0
        %1379 = vmatpush1.bf16.msra.mxu0 0
        %1380 = vmatprep.mubr.bf16.mxu0 0
        %1381 = vmatmul.mubr.bf16.gmra.mrb[0].mxu0 %v1346
        %v1382 = vpop.f32.mrb[0].mxu0
        %v1383 = vadd.f32 0.0, %v1382
        %v1384 = vpop.f32.mrb[0].mxu0
        %v1385 = vpop.f32.mrb[0].mxu0
        %v1386 = vpop.f32.mrb[0].mxu0
        %1387 = vdwg.mxu0
        %v1388 = vrcp.pop %v883
        %v1390 = vrot.slane %v1388, 1
        %v1391 = vrot.slane %v1388, 2
        %v1392 = vrot.slane %v1388, 3
        %v1393 = vrot.slane %v1388, 4
        %v1394 = vrot.slane %v1388, 5
        %v1395 = vrot.slane %v1388, 6
        %v1396 = vrot.slane %v1388, 7
        %v1405 = vmul.f32 %v949, %v1388
        %v1406 = vmul.f32 %v1011, %v1390
        %v1407 = vmul.f32 %v1073, %v1391
        %v1408 = vmul.f32 %v1135, %v1392
        %v1409 = vmul.f32 %v1197, %v1393
        %v1410 = vmul.f32 %v1259, %v1394
        %v1411 = vmul.f32 %v1321, %v1395
        %v1412 = vmul.f32 %v1383, %v1396
        %v1421 = vrot.slane %v1406, 7
        %v1422 = vsel %vm629, %v1421, %v1405
        %v1423 = vrot.slane %v1407, 6
        %v1424 = vsel %vm631, %v1423, %v1422
        %v1425 = vrot.slane %v1408, 5
        %v1426 = vsel %vm633, %v1425, %v1424
        %v1427 = vrot.slane %v1409, 4
        %v1428 = vsel %vm635, %v1427, %v1426
        %v1429 = vrot.slane %v1410, 3
        %v1430 = vsel %vm637, %v1429, %v1428
        %v1431 = vrot.slane %v1411, 2
        %v1432 = vsel %vm639, %v1431, %v1430
        %v1433 = vrot.slane %v1412, 1
        %v1434 = vsel %vm641, %v1433, %v1432
        %1436 = vst [vmem:[%s231] sm:$0xff] %v1434
        %s1437 = sand.u32 %s119, 1
        %s1438 = scalar_lea.sflag [#allocation4], %s1437
        %s1439 = sand.u32 %s119, 1
        %s1440 = smul.addr %s1439, 8
        %s1441 = scalar_lea.vmem [#allocation7], %s1440
        // Predicated region
        $region45: #{tpu_custom_call.1} parent=35 // pred_check
          %p1442 = pneg %p129
        $region46: #{tpu_custom_call.1} parent=35 // pred_check_branch
          %1444 = sbr.rel (%p1442) target = $region48
        $region47: #{tpu_custom_call.1} parent=35 // pred_region
          %s1446 = ssub.s32 128, 128
          %1447 = vsyncadd %s1438, %s1446
          %s1448 = smul.addr %s22, 128
          %s1449 = scalar_lea.hbm %s4, %s1448
          %s1451 = sshll.u32 %s1441, 4
          %s1452 = int_to_ptr.vmem [resolvable:$true] %s1451
          %1454 = dma.vmem_to_hbm [thread:$0]  %s1452, 128, %s1449, %s1438
        $region48: #{tpu_custom_call.1} parent=35 // pred_fallthru
          _
      $region36: #{tpu_custom_call.1} parent=5 // pred_fallthru
        _
      %p1455 = scmp.le.s32.totalorder 2, %s17
      // Predicated region
      $region49: #{tpu_custom_call.1} parent=5 // pred_check
        %p1456 = pneg %p1455
      $region50: #{tpu_custom_call.1} parent=5 // pred_check_branch
        %1458 = sbr.rel (%p1456) target = $region52
      $region51: #{tpu_custom_call.1} parent=5 // pred_region
        %s1459 = ssub.s32 %s17, 2
        // Predicated region
        $region53: #{tpu_custom_call.1} parent=51 // pred_check
          %p1460 = pneg %p135
        $region54: #{tpu_custom_call.1} parent=51 // pred_check_branch
          %1462 = sbr.rel (%p1460) target = $region56
        $region55: #{tpu_custom_call.1} parent=51 // pred_region
          %s1463 = sand.u32 %s120, 1
          %s1464 = scalar_lea.sflag [#allocation4], %s1463
          %s1465 = sand.u32 %s120, 1
          %s1466 = smul.addr %s1465, 8
          %s1467 = scalar_lea.vmem [#allocation7], %s1466
          %1468 = dma.done %s1464, 128
        $region56: #{tpu_custom_call.1} parent=51 // pred_fallthru
          _
      $region52: #{tpu_custom_call.1} parent=5 // pred_fallthru
        _
    $region6: #{tpu_custom_call.1} parent=1 // loop_footer
      %s21 = sadd.s32 1, %s17
    $region7: #{tpu_custom_call.1} parent=1 // loop_footer_branch
      %16 = sbr.rel target = $region3
    $region8: #{tpu_custom_call.1} parent=1 // loop_exit
      _
    %1469 = vsyncpa [#allocation3], 1
    %s1470 = scalar_lea.sflag [#allocation3], 1
    %1471 = vsyncpa %s1470, 1
    %1472 = vsyncpa [#allocation6], 1
    %1473 = vsyncpa [#allocation4], 1
    %s1474 = scalar_lea.sflag [#allocation4], 1
    %1475 = vsyncpa %s1474, 1

</llo_original>
